<compile_context>
chip_gen: v7x
topology: tpu7x:2x2x1
jax: 0.10.0
libtpu: 0.0.40
codegen_flags: <defaults>
</compile_context>

<pallas_src>
import functools

import jax
import jax.numpy as jnp
from jax.experimental import pallas as pl
from jax.experimental.pallas import tpu as pltpu


_TILE_BUDGET_BYTES = 4 * 1024 * 1024   # per input buffer (pipeline double-buffers)
_VMEM_LIMIT_BYTES = 32 * 1024 * 1024   # comfortably legal on v5e / v6e / v7x


def _round_up(a, b):
    return ((a + b - 1) // b) * b


def _logvar_kernel(x_ref, o_ref, *, n_reduce):
    """Full-T block: two-pass (numerically stable) variance per row."""
    x = x_ref[...].astype(jnp.float32)
    mean = jnp.mean(x, axis=-1, keepdims=True)
    d = x - mean
    # unbiased variance (matches torch.var default: divide by N-1)
    var = jnp.sum(d * d, axis=-1, keepdims=True) / jnp.float32(n_reduce - 1)
    var = jnp.clip(var, 1e-6, 1e6)
    o_ref[...] = jnp.log(var).astype(o_ref.dtype)


def _logvar_tiled_kernel(x_ref, o_ref, sum_ref, sumsq_ref, *, n_reduce, tt):
    """T tiled on grid axis 1: accumulate sum / sum-of-squares, finalize last.

    Single-pass formula var = (sumsq - sum^2/N) / (N-1); band-filtered EEG is
    ~zero-mean so f32 accumulation is accurate enough here.
    """
    k = pl.program_id(1)

    @pl.when(k == 0)
    def _():
        sum_ref[...] = jnp.zeros_like(sum_ref)
        sumsq_ref[...] = jnp.zeros_like(sumsq_ref)

    x = x_ref[...].astype(jnp.float32)
    # Mask lanes past the true end of the reduce axis (ragged last T tile).
    col = jax.lax.broadcasted_iota(jnp.int32, x.shape, 1) + k * tt
    x = jnp.where(col < n_reduce, x, 0.0)
    sum_ref[...] += jnp.sum(x, axis=-1, keepdims=True)
    sumsq_ref[...] += jnp.sum(x * x, axis=-1, keepdims=True)

    @pl.when(k == pl.num_programs(1) - 1)
    def _():
        n = jnp.float32(n_reduce)
        s = sum_ref[...]
        var = (sumsq_ref[...] - s * s / n) / (n - 1.0)
        var = jnp.clip(var, 1e-6, 1e6)
        o_ref[...] = jnp.log(var).astype(o_ref.dtype)


def log_var_layer(x, dim, *, tile_budget_bytes=_TILE_BUDGET_BYTES):
    """Pallas implementation of LogVarLayer.forward.

    Args:
      x:   jnp.ndarray of rank >= 1.
      dim: axis to compute variance over (keepdim=True in the output).
    Returns:
      array with the shape of x but size-1 along `dim`.
    """
    ndim = x.ndim
    dim = dim % ndim

    # Fast path: FBCNet reduces the last axis (dim=3) -> pure reshape, no HBM
    # transpose. For other dims the moveaxis materializes a transpose in HBM.
    x2 = x if dim == ndim - 1 else jnp.moveaxis(x, dim, -1)
    lead_shape = x2.shape[:-1]
    T = x2.shape[-1]
    R = 1
    for s in lead_shape:
        R *= s
    x2 = x2.reshape(R, T)

    # Budget-driven tiling (count f32 bytes; conservative for narrower dtypes).
    row_bytes = max(T, 1) * 4
    tr_full = (tile_budget_bytes // row_bytes) // 8 * 8
    # Prefer tiling T over shrinking the row tile below ~128 rows.
    use_tiled_t = tr_full < min(128, _round_up(R, 8))

    if not use_tiled_t:
        tr = min(tr_full, _round_up(R, 8))
        grid = (pl.cdiv(R, tr),)
        out2 = pl.pallas_call(
            functools.partial(_logvar_kernel, n_reduce=T),
            out_shape=jax.ShapeDtypeStruct((R, 1), x.dtype),
            grid_spec=pltpu.PrefetchScalarGridSpec(
                num_scalar_prefetch=0,
                grid=grid,
                in_specs=[pl.BlockSpec((tr, T), lambda i: (i, 0))],
                out_specs=pl.BlockSpec((tr, 1), lambda i: (i, 0)),
            ),
            compiler_params=pltpu.CompilerParams(
                dimension_semantics=("parallel",),
                vmem_limit_bytes=_VMEM_LIMIT_BYTES,
            ),
        )(x2)
    else:
        tr = min(256, _round_up(R, 8))
        tt = (tile_budget_bytes // (tr * 4)) // 128 * 128
        tt = max(128, min(tt, _round_up(T, 128)))
        grid = (pl.cdiv(R, tr), pl.cdiv(T, tt))
        out2 = pl.pallas_call(
            functools.partial(_logvar_tiled_kernel, n_reduce=T, tt=tt),
            out_shape=jax.ShapeDtypeStruct((R, 1), x.dtype),
            grid_spec=pltpu.PrefetchScalarGridSpec(
                num_scalar_prefetch=0,
                grid=grid,
                in_specs=[pl.BlockSpec((tr, tt), lambda i, k: (i, k))],
                out_specs=pl.BlockSpec((tr, 1), lambda i, k: (i, 0)),
                scratch_shapes=[
                    pltpu.VMEM((tr, 1), jnp.float32),
                    pltpu.VMEM((tr, 1), jnp.float32),
                ],
            ),
            compiler_params=pltpu.CompilerParams(
                dimension_semantics=("parallel", "arbitrary"),
                vmem_limit_bytes=_VMEM_LIMIT_BYTES,
            ),
        )(x2)

    # Restore original layout with keepdim=True along `dim`.
    out = out2.reshape(lead_shape + (1,))
    if dim != ndim - 1:
        out = jnp.moveaxis(out, -1, dim)
    return out


if __name__ == "__main__":
    key = jax.random.PRNGKey(0)

    # FBCNet-style input: (batch, nBands, m, timepoints), reduce over dim=3.
    B, C, M, T = 2, 4, 16, 16
    x = jax.random.normal(key, (B, C, M, T), dtype=jnp.float32)
    dim = 3
    out = jax.block_until_ready(log_var_layer(x, dim))
    ref_var = jnp.var(x, axis=dim, keepdims=True, ddof=1)
    ref = jnp.log(jnp.clip(ref_var, 1e-6, 1e6))
    assert out.shape == (B, C, M, 1), out.shape
    assert jnp.allclose(out, ref, atol=1e-5, rtol=1e-5), (
        float(jnp.max(jnp.abs(out - ref)))
    )

    # Exercise the tiled-T accumulator path (ragged last T tile, masked) by
    # forcing a tiny per-buffer VMEM budget.
    x2 = jax.random.normal(jax.random.PRNGKey(0), (2, 4, 8, 300),
                           dtype=jnp.float32)
    out2 = jax.block_until_ready(log_var_layer(x2, 3, tile_budget_bytes=4096))
    ref2 = jnp.log(jnp.clip(jnp.var(x2, axis=3, keepdims=True, ddof=1),
                            1e-6, 1e6))
    assert out2.shape == (2, 4, 8, 1), out2.shape
    assert jnp.allclose(out2, ref2, atol=1e-4, rtol=1e-4), (
        float(jnp.max(jnp.abs(out2 - ref2)))
    )

    print("KERNEL_OK")
</pallas_src>

<mosaic_0001>
module attributes {stable_mosaic.version = 11 : i64} {
  func.func @_logvar_kernel(%arg0: i32, %arg1: memref<128x16xf32, #tpu.memory_space<vmem>>, %arg2: memref<128x1xf32, #tpu.memory_space<vmem>>) attributes {dimension_semantics = [#tpu.dimension_semantics<parallel>], iteration_bounds = array<i64: 1>, scalar_prefetch = 0 : i64, scratch_operands = 0 : i64, tpu.core_type = #tpu.core_type<tc>, window_params = [{transform_indices = @transform_0, window_bounds = array<i64: 128, 16>}, {transform_indices = @transform_1, window_bounds = array<i64: 128, 1>}]} {
    %c0 = arith.constant 0 : index
    %c0_0 = arith.constant 0 : index
    %0 = vector.load %arg1[%c0, %c0_0] : memref<128x16xf32, #tpu.memory_space<vmem>>, vector<128x16xf32>
    %cst = arith.constant dense<0.000000e+00> : vector<128xf32>
    %1 = vector.multi_reduction <add>, %0, %cst [1] : vector<128x16xf32> to vector<128xf32>
    %2 = vector.shape_cast %1 : vector<128xf32> to vector<128x1xf32>
    %cst_1 = arith.constant 1.600000e+01 : f32
    %3 = vector.broadcast %cst_1 : f32 to vector<128x1xf32>
    %4 = arith.divf %2, %3 : vector<128x1xf32>
    %5 = vector.broadcast %4 : vector<128x1xf32> to vector<128x16xf32>
    %6 = arith.subf %0, %5 : vector<128x16xf32>
    %7 = arith.mulf %6, %6 : vector<128x16xf32>
    %cst_2 = arith.constant dense<0.000000e+00> : vector<128xf32>
    %8 = vector.multi_reduction <add>, %7, %cst_2 [1] : vector<128x16xf32> to vector<128xf32>
    %9 = vector.shape_cast %8 : vector<128xf32> to vector<128x1xf32>
    %cst_3 = arith.constant 1.500000e+01 : f32
    %10 = vector.broadcast %cst_3 : f32 to vector<128x1xf32>
    %11 = arith.divf %9, %10 : vector<128x1xf32>
    %cst_4 = arith.constant 9.99999997E-7 : f32
    %cst_5 = arith.constant 1.000000e+06 : f32
    %12 = vector.broadcast %cst_4 : f32 to vector<128x1xf32>
    %13 = arith.maximumf %12, %11 : vector<128x1xf32>
    %14 = vector.broadcast %cst_5 : f32 to vector<128x1xf32>
    %15 = arith.minimumf %14, %13 : vector<128x1xf32>
    %16 = math.log %15 : vector<128x1xf32>
    %c0_6 = arith.constant 0 : index
    %c0_7 = arith.constant 0 : index
    %17 = vector.load %arg2[%c0_6, %c0_7] : memref<128x1xf32, #tpu.memory_space<vmem>>, vector<128x1xf32>
    tpu.vector_store %arg2[%c0_6, %c0_7], %16 {strides = array<i32>} : memref<128x1xf32, #tpu.memory_space<vmem>>, vector<128x1xf32>,
    return
  }
  func.func @transform_0(%arg0: i32) -> (i32, i32) {
    %c0_i32 = arith.constant 0 : i32
    %c0_i32_0 = arith.constant 0 : i32
    return %arg0, %c0_i32 : i32, i32
  }
  func.func @transform_1(%arg0: i32) -> (i32, i32) {
    %c0_i32 = arith.constant 0 : i32
    %c0_i32_0 = arith.constant 0 : i32
    return %arg0, %c0_i32 : i32, i32
  }
}

</mosaic_0001>

<llo_original>
// kernel: tpu_custom_call.1
$region0: #{tpu_custom_call.1}
  #allocation0 [shape = 'u32[]', space=smem, size = 0x4, offset = 0x4, fixed_abs, tag = 'smem constant byte address 0x4 - core index']
  #allocation1 [shape = 'u32[144,128]{1,0:T(1,128)}', space=vmem, size = 0x12000, scoped, tag = 'internal scratch']
  %s0 = inlined_call_operand.vmem [shape: f32[128,16], index: 0, kind: input, shape index: {}]
  %s1 = inlined_call_operand.vmem [shape: f32[128,1], index: 1, kind: output, shape index: {}]
  %s2 = sld [smem:[#allocation0]]
  $region14: #{tpu_custom_call.1} parent=0
    _
  %s4 = ssub.s32 1, %s2
  %s5 = scalar_select 0, %s4, %s2
  // Predicated region
  $region2: #{tpu_custom_call.1} parent=0 // pred_check
    _
  $region3: #{tpu_custom_call.1} parent=0 // pred_check_branch
    %7 = sbr.rel (0) target = $region5
  $region4: #{tpu_custom_call.1} parent=0 // pred_region
    _
  $region5: #{tpu_custom_call.1} parent=0 // pred_fallthru
    _
  %v8 = vld [vmem:[%s0] sm:$0xff]
  %v9 = vld [vmem:[%s0 + $0x8] sm:$0xff]
  %v10 = vld [vmem:[%s0 + $0x10] sm:$0xff]
  %v11 = vld [vmem:[%s0 + $0x18] sm:$0xff]
  %v12 = vld [vmem:[%s0 + $0x20] sm:$0xff]
  %v13 = vld [vmem:[%s0 + $0x28] sm:$0xff]
  %v14 = vld [vmem:[%s0 + $0x30] sm:$0xff]
  %v15 = vld [vmem:[%s0 + $0x38] sm:$0xff]
  %v16 = vld [vmem:[%s0 + $0x40] sm:$0xff]
  %v17 = vld [vmem:[%s0 + $0x48] sm:$0xff]
  %v18 = vld [vmem:[%s0 + $0x50] sm:$0xff]
  %v19 = vld [vmem:[%s0 + $0x58] sm:$0xff]
  %v20 = vld [vmem:[%s0 + $0x60] sm:$0xff]
  %v21 = vld [vmem:[%s0 + $0x68] sm:$0xff]
  %v22 = vld [vmem:[%s0 + $0x70] sm:$0xff]
  %v23 = vld [vmem:[%s0 + $0x78] sm:$0xff]
  %vm24 = vcmask 130048
  %v25 = vsel %vm24, %v8, 0.0
  %26 = vadd.xlane.f32.xlu0 %v25
  %v27 = vpop.xlane.xlu0 %26
  %v28 = vsel %vm24, %v9, 0.0
  %29 = vadd.xlane.f32.xlu0 %v28
  %v30 = vpop.xlane.xlu0 %29
  %v31 = vsel %vm24, %v10, 0.0
  %32 = vadd.xlane.f32.xlu0 %v31
  %v33 = vpop.xlane.xlu0 %32
  %v34 = vsel %vm24, %v11, 0.0
  %35 = vadd.xlane.f32.xlu0 %v34
  %v36 = vpop.xlane.xlu0 %35
  %v37 = vsel %vm24, %v12, 0.0
  %38 = vadd.xlane.f32.xlu0 %v37
  %v39 = vpop.xlane.xlu0 %38
  %v40 = vsel %vm24, %v13, 0.0
  %41 = vadd.xlane.f32.xlu0 %v40
  %v42 = vpop.xlane.xlu0 %41
  %v43 = vsel %vm24, %v14, 0.0
  %44 = vadd.xlane.f32.xlu0 %v43
  %v45 = vpop.xlane.xlu0 %44
  %v46 = vsel %vm24, %v15, 0.0
  %47 = vadd.xlane.f32.xlu0 %v46
  %v48 = vpop.xlane.xlu0 %47
  %v49 = vsel %vm24, %v16, 0.0
  %50 = vadd.xlane.f32.xlu0 %v49
  %v51 = vpop.xlane.xlu0 %50
  %v52 = vsel %vm24, %v17, 0.0
  %53 = vadd.xlane.f32.xlu0 %v52
  %v54 = vpop.xlane.xlu0 %53
  %v55 = vsel %vm24, %v18, 0.0
  %56 = vadd.xlane.f32.xlu0 %v55
  %v57 = vpop.xlane.xlu0 %56
  %v58 = vsel %vm24, %v19, 0.0
  %59 = vadd.xlane.f32.xlu0 %v58
  %v60 = vpop.xlane.xlu0 %59
  %v61 = vsel %vm24, %v20, 0.0
  %62 = vadd.xlane.f32.xlu0 %v61
  %v63 = vpop.xlane.xlu0 %62
  %v64 = vsel %vm24, %v21, 0.0
  %65 = vadd.xlane.f32.xlu0 %v64
  %v66 = vpop.xlane.xlu0 %65
  %v67 = vsel %vm24, %v22, 0.0
  %68 = vadd.xlane.f32.xlu0 %v67
  %v69 = vpop.xlane.xlu0 %68
  %v70 = vsel %vm24, %v23, 0.0
  %71 = vadd.xlane.f32.xlu0 %v70
  %v72 = vpop.xlane.xlu0 %71
  %v73 = vrcp.pop 16.0
  %v74 = vmul.f32 %v27, %v73
  %v75 = vmul.f32 %v30, %v73
  %v76 = vmul.f32 %v33, %v73
  %v77 = vmul.f32 %v36, %v73
  %v78 = vmul.f32 %v39, %v73
  %v79 = vmul.f32 %v42, %v73
  %v80 = vmul.f32 %v45, %v73
  %v81 = vmul.f32 %v48, %v73
  %v82 = vmul.f32 %v51, %v73
  %v83 = vmul.f32 %v54, %v73
  %v84 = vmul.f32 %v57, %v73
  %v85 = vmul.f32 %v60, %v73
  %v86 = vmul.f32 %v63, %v73
  %v87 = vmul.f32 %v66, %v73
  %v88 = vmul.f32 %v69, %v73
  %v89 = vmul.f32 %v72, %v73
  %v90 = vsub.f32 %v8, %v74
  %v91 = vsub.f32 %v9, %v75
  %v92 = vsub.f32 %v10, %v76
  %v93 = vsub.f32 %v11, %v77
  %v94 = vsub.f32 %v12, %v78
  %v95 = vsub.f32 %v13, %v79
  %v96 = vsub.f32 %v14, %v80
  %v97 = vsub.f32 %v15, %v81
  %v98 = vsub.f32 %v16, %v82
  %v99 = vsub.f32 %v17, %v83
  %v100 = vsub.f32 %v18, %v84
  %v101 = vsub.f32 %v19, %v85
  %v102 = vsub.f32 %v20, %v86
  %v103 = vsub.f32 %v21, %v87
  %v104 = vsub.f32 %v22, %v88
  %v105 = vsub.f32 %v23, %v89
  %v106 = vmul.f32 %v90, %v90
  %v107 = vmul.f32 %v91, %v91
  %v108 = vmul.f32 %v92, %v92
  %v109 = vmul.f32 %v93, %v93
  %v110 = vmul.f32 %v94, %v94
  %v111 = vmul.f32 %v95, %v95
  %v112 = vmul.f32 %v96, %v96
  %v113 = vmul.f32 %v97, %v97
  %v114 = vmul.f32 %v98, %v98
  %v115 = vmul.f32 %v99, %v99
  %v116 = vmul.f32 %v100, %v100
  %v117 = vmul.f32 %v101, %v101
  %v118 = vmul.f32 %v102, %v102
  %v119 = vmul.f32 %v103, %v103
  %v120 = vmul.f32 %v104, %v104
  %v121 = vmul.f32 %v105, %v105
  %v122 = vsel %vm24, %v106, 0.0
  %123 = vadd.xlane.f32.xlu0 %v122
  %v124 = vpop.xlane.xlu0 %123
  %v125 = vsel %vm24, %v107, 0.0
  %126 = vadd.xlane.f32.xlu0 %v125
  %v127 = vpop.xlane.xlu0 %126
  %v128 = vsel %vm24, %v108, 0.0
  %129 = vadd.xlane.f32.xlu0 %v128
  %v130 = vpop.xlane.xlu0 %129
  %v131 = vsel %vm24, %v109, 0.0
  %132 = vadd.xlane.f32.xlu0 %v131
  %v133 = vpop.xlane.xlu0 %132
  %v134 = vsel %vm24, %v110, 0.0
  %135 = vadd.xlane.f32.xlu0 %v134
  %v136 = vpop.xlane.xlu0 %135
  %v137 = vsel %vm24, %v111, 0.0
  %138 = vadd.xlane.f32.xlu0 %v137
  %v139 = vpop.xlane.xlu0 %138
  %v140 = vsel %vm24, %v112, 0.0
  %141 = vadd.xlane.f32.xlu0 %v140
  %v142 = vpop.xlane.xlu0 %141
  %v143 = vsel %vm24, %v113, 0.0
  %144 = vadd.xlane.f32.xlu0 %v143
  %v145 = vpop.xlane.xlu0 %144
  %v146 = vsel %vm24, %v114, 0.0
  %147 = vadd.xlane.f32.xlu0 %v146
  %v148 = vpop.xlane.xlu0 %147
  %v149 = vsel %vm24, %v115, 0.0
  %150 = vadd.xlane.f32.xlu0 %v149
  %v151 = vpop.xlane.xlu0 %150
  %v152 = vsel %vm24, %v116, 0.0
  %153 = vadd.xlane.f32.xlu0 %v152
  %v154 = vpop.xlane.xlu0 %153
  %v155 = vsel %vm24, %v117, 0.0
  %156 = vadd.xlane.f32.xlu0 %v155
  %v157 = vpop.xlane.xlu0 %156
  %v158 = vsel %vm24, %v118, 0.0
  %159 = vadd.xlane.f32.xlu0 %v158
  %v160 = vpop.xlane.xlu0 %159
  %v161 = vsel %vm24, %v119, 0.0
  %162 = vadd.xlane.f32.xlu0 %v161
  %v163 = vpop.xlane.xlu0 %162
  %v164 = vsel %vm24, %v120, 0.0
  %165 = vadd.xlane.f32.xlu0 %v164
  %v166 = vpop.xlane.xlu0 %165
  %v167 = vsel %vm24, %v121, 0.0
  %168 = vadd.xlane.f32.xlu0 %v167
  %v169 = vpop.xlane.xlu0 %168
  %v170 = vrcp.pop 15.0
  %v171 = vmul.f32 %v124, %v170
  %v172 = vmul.f32 %v127, %v170
  %v173 = vmul.f32 %v130, %v170
  %v174 = vmul.f32 %v133, %v170
  %v175 = vmul.f32 %v136, %v170
  %v176 = vmul.f32 %v139, %v170
  %v177 = vmul.f32 %v142, %v170
  %v178 = vmul.f32 %v145, %v170
  %v179 = vmul.f32 %v148, %v170
  %v180 = vmul.f32 %v151, %v170
  %v181 = vmul.f32 %v154, %v170
  %v182 = vmul.f32 %v157, %v170
  %v183 = vmul.f32 %v160, %v170
  %v184 = vmul.f32 %v163, %v170
  %v185 = vmul.f32 %v166, %v170
  %v186 = vmul.f32 %v169, %v170
  %v187 = vmax.f32 %v171, 1e-06
  %v188 = vmax.f32 %v172, 1e-06
  %v189 = vmax.f32 %v173, 1e-06
  %v190 = vmax.f32 %v174, 1e-06
  %v191 = vmax.f32 %v175, 1e-06
  %v192 = vmax.f32 %v176, 1e-06
  %v193 = vmax.f32 %v177, 1e-06
  %v194 = vmax.f32 %v178, 1e-06
  %v195 = vmax.f32 %v179, 1e-06
  %v196 = vmax.f32 %v180, 1e-06
  %v197 = vmax.f32 %v181, 1e-06
  %v198 = vmax.f32 %v182, 1e-06
  %v199 = vmax.f32 %v183, 1e-06
  %v200 = vmax.f32 %v184, 1e-06
  %v201 = vmax.f32 %v185, 1e-06
  %v202 = vmax.f32 %v186, 1e-06
  %v203 = vmin.f32 %v187, 1000000.0
  %v204 = vmin.f32 %v188, 1000000.0
  %v205 = vmin.f32 %v189, 1000000.0
  %v206 = vmin.f32 %v190, 1000000.0
  %v207 = vmin.f32 %v191, 1000000.0
  %v208 = vmin.f32 %v192, 1000000.0
  %v209 = vmin.f32 %v193, 1000000.0
  %v210 = vmin.f32 %v194, 1000000.0
  %v211 = vmin.f32 %v195, 1000000.0
  %v212 = vmin.f32 %v196, 1000000.0
  %v213 = vmin.f32 %v197, 1000000.0
  %v214 = vmin.f32 %v198, 1000000.0
  %v215 = vmin.f32 %v199, 1000000.0
  %v216 = vmin.f32 %v200, 1000000.0
  %v217 = vmin.f32 %v201, 1000000.0
  %v218 = vmin.f32 %v202, 1000000.0
  %v219 = vlog2.pop %v203
  %v220 = vmul.f32 %v219, 0.6931472
  %v221 = vlog2.pop %v204
  %v222 = vmul.f32 %v221, 0.6931472
  %v223 = vlog2.pop %v205
  %v224 = vmul.f32 %v223, 0.6931472
  %v225 = vlog2.pop %v206
  %v226 = vmul.f32 %v225, 0.6931472
  %v227 = vlog2.pop %v207
  %v228 = vmul.f32 %v227, 0.6931472
  %v229 = vlog2.pop %v208
  %v230 = vmul.f32 %v229, 0.6931472
  %v231 = vlog2.pop %v209
  %v232 = vmul.f32 %v231, 0.6931472
  %v233 = vlog2.pop %v210
  %v234 = vmul.f32 %v233, 0.6931472
  %v235 = vlog2.pop %v211
  %v236 = vmul.f32 %v235, 0.6931472
  %v237 = vlog2.pop %v212
  %v238 = vmul.f32 %v237, 0.6931472
  %v239 = vlog2.pop %v213
  %v240 = vmul.f32 %v239, 0.6931472
  %v241 = vlog2.pop %v214
  %v242 = vmul.f32 %v241, 0.6931472
  %v243 = vlog2.pop %v215
  %v244 = vmul.f32 %v243, 0.6931472
  %v245 = vlog2.pop %v216
  %v246 = vmul.f32 %v245, 0.6931472
  %v247 = vlog2.pop %v217
  %v248 = vmul.f32 %v247, 0.6931472
  %v249 = vlog2.pop %v218
  %v250 = vmul.f32 %v249, 0.6931472
  %vm251 = vcmask 7168
  %252 = vst.msk [vmem:[%s1] sm:$0xff] %vm251, %v220
  %253 = vst.msk [vmem:[%s1 + $0x8] sm:$0xff] %vm251, %v222
  %254 = vst.msk [vmem:[%s1 + $0x10] sm:$0xff] %vm251, %v224
  %255 = vst.msk [vmem:[%s1 + $0x18] sm:$0xff] %vm251, %v226
  %256 = vst.msk [vmem:[%s1 + $0x20] sm:$0xff] %vm251, %v228
  %257 = vst.msk [vmem:[%s1 + $0x28] sm:$0xff] %vm251, %v230
  %258 = vst.msk [vmem:[%s1 + $0x30] sm:$0xff] %vm251, %v232
  %259 = vst.msk [vmem:[%s1 + $0x38] sm:$0xff] %vm251, %v234
  %260 = vst.msk [vmem:[%s1 + $0x40] sm:$0xff] %vm251, %v236
  %261 = vst.msk [vmem:[%s1 + $0x48] sm:$0xff] %vm251, %v238
  %262 = vst.msk [vmem:[%s1 + $0x50] sm:$0xff] %vm251, %v240
  %263 = vst.msk [vmem:[%s1 + $0x58] sm:$0xff] %vm251, %v242
  %264 = vst.msk [vmem:[%s1 + $0x60] sm:$0xff] %vm251, %v244
  %265 = vst.msk [vmem:[%s1 + $0x68] sm:$0xff] %vm251, %v246
  %266 = vst.msk [vmem:[%s1 + $0x70] sm:$0xff] %vm251, %v248
  %267 = vst.msk [vmem:[%s1 + $0x78] sm:$0xff] %vm251, %v250
  // Predicated region
  $region6: #{tpu_custom_call.1} parent=0 // pred_check
    _
  $region7: #{tpu_custom_call.1} parent=0 // pred_check_branch
    %269 = sbr.rel (0) target = $region9
  $region8: #{tpu_custom_call.1} parent=0 // pred_region
    _
  $region9: #{tpu_custom_call.1} parent=0 // pred_fallthru
    _
  // Predicated region
  $region10: #{tpu_custom_call.1} parent=0 // pred_check
    _
  $region11: #{tpu_custom_call.1} parent=0 // pred_check_branch
    %271 = sbr.rel (0) target = $region13
  $region12: #{tpu_custom_call.1} parent=0 // pred_region
    _
  $region13: #{tpu_custom_call.1} parent=0 // pred_fallthru
    _

</llo_original>
